<compile_context>
chip_gen: v7x
topology: tpu7x:2x2x1
jax: 0.10.0
libtpu: 0.0.40
codegen_flags: <defaults>
</compile_context>

<pallas_src>
import functools
import math

import jax
import jax.numpy as jnp
from jax import lax
from jax.experimental import pallas as pl
from jax.experimental.pallas import tpu as pltpu


# ----------------------------------------------------------------------------
# Kernel
# ----------------------------------------------------------------------------
def _ot_aligner_kernel(x_ct_ref, x_txt_ref, x_lab_ref,
                       wt_ct_ref, wt_txt_ref, wt_lab_ref,
                       aligned_ref, partial_ref,
                       *, eps: float, n_iter: int, batch: int, tile_b: int,
                       need_mask: bool):
    # wt_* are already [in_dim, proj_dim] (transposed + cast in the wrapper),
    # so these are plain [M,K] x [K,N] MXU matmuls with f32 accumulation.
    z_ct = jnp.dot(x_ct_ref[...], wt_ct_ref[...],
                   preferred_element_type=jnp.float32)
    z_txt = jnp.dot(x_txt_ref[...], wt_txt_ref[...],
                    preferred_element_type=jnp.float32)
    z_lab = jnp.dot(x_lab_ref[...], wt_lab_ref[...],
                    preferred_element_type=jnp.float32)

    aligned_ref[...] = ((z_ct + z_txt + z_lab) * (1.0 / 3.0)).astype(
        aligned_ref.dtype)

    # Per-row squared L2 cost for the three modality pairs (the N=1 cdist^2).
    # Reuse one difference:  z_txt - z_lab == (z_ct - z_lab) - (z_ct - z_txt).
    d_ct_txt = z_ct - z_txt
    d_ct_lab = z_ct - z_lab
    d_txt_lab = d_ct_lab - d_ct_txt
    c1 = jnp.sum(d_ct_txt * d_ct_txt, axis=-1, keepdims=True)    # [tile_b, 1]
    c2 = jnp.sum(d_ct_lab * d_ct_lab, axis=-1, keepdims=True)
    c3 = jnp.sum(d_txt_lab * d_txt_lab, axis=-1, keepdims=True)

    if n_iter >= 1:
        # Exact Sinkhorn fixed point for N=1: T = 1, transport cost = C,
        # entropic term = -eps (the constant is added in the wrapper).
        per_row = c1 + c2 + c3
    else:
        # n_iter == 0: T = exp(-C/eps), transport + entropic = -eps * T.
        inv_eps = 1.0 / eps
        per_row = -eps * (jnp.exp(-c1 * inv_eps)
                          + jnp.exp(-c2 * inv_eps)
                          + jnp.exp(-c3 * inv_eps))

    if need_mask:
        # Only generated when the last batch tile is actually padded.
        row_idx = (pl.program_id(0) * tile_b
                   + lax.broadcasted_iota(jnp.int32, (tile_b, 1), 0))
        per_row = jnp.where(row_idx < batch, per_row, 0.0)

    # Lane-dense (8,128) per-tile partial; final tiny reduction in the wrapper
    # keeps the batch grid axis fully parallel across TensorCores.
    partial_ref[...] = jnp.full(partial_ref.shape, jnp.sum(per_row),
                                dtype=partial_ref.dtype)


# ----------------------------------------------------------------------------
# Wrapper helpers
# ----------------------------------------------------------------------------
_MAX_TILE_B = 1024   # 512-1024 row tiles measure ~85% of HBM roofline


def _choose_tile(batch: int):
    """Pick (tile_b, num_tiles): tile_b multiple of 8, <= _MAX_TILE_B, and an
    even tile count (>= 2) for batch > 8 so v7x's two TensorCores share work."""
    if batch <= 8:
        return batch, 1
    pairs = max(1, -(-batch // (2 * _MAX_TILE_B)))      # ceil
    tile_b = -(-batch // (2 * pairs))                    # ceil(batch / (2*pairs))
    tile_b = ((tile_b + 7) // 8) * 8
    num_tiles = -(-batch // tile_b)
    return tile_b, num_tiles


def _vmem_limit_bytes():
    """~0.75x of this chip's per-core VMEM (fallback: v7x's 64 MiB)."""
    cap = 64 * 1024 * 1024
    try:
        cap = int(getattr(pltpu.get_tpu_info(), "vmem_capacity_bytes", cap))
    except Exception:
        pass
    return int(0.75 * cap)


def _resident_spec(shape):
    """BlockSpec for an operand whose block index never changes: single-buffer
    it (pl.Buffered(1)); double-buffering would only double its VMEM cost."""
    idx = lambda i: (0, 0)
    try:
        return pl.BlockSpec(shape, idx, pipeline_mode=pl.Buffered(1))
    except Exception:
        return pl.BlockSpec(shape, idx)


# ----------------------------------------------------------------------------
# Public forward
# ----------------------------------------------------------------------------
def ot_aligner_forward(x_ct, x_txt, x_lab, w_ct, w_txt, w_lab, *,
                       eps: float = 0.05, n_iter: int = 50,
                       compute_dtype=jnp.bfloat16, out_dtype=jnp.float32):
    """Pallas implementation of OTAligner.forward.

    x_* : [B, in_dim] float32
    w_* : [proj_dim, in_dim] float32 (nn.Linear weight layout, bias=False)
    Returns (aligned [B, proj_dim] out_dtype, ot_loss scalar float32).
    """
    B, in_dim = x_ct.shape
    proj_dim = w_ct.shape[0]

    tile_b, num_tiles = _choose_tile(B)
    need_mask = (num_tiles * tile_b != B)

    # bf16 I/O (default) halves the dominant HBM read traffic and is the
    # native MXU input dtype on all generations; accumulation stays f32.
    x_ct_c = x_ct.astype(compute_dtype)
    x_txt_c = x_txt.astype(compute_dtype)
    x_lab_c = x_lab.astype(compute_dtype)
    # One-time transpose (+cast) to [in_dim, proj_dim]: removes any per-tile
    # XLU transpose implied by a (1,1)-axis contraction inside the kernel.
    wt_ct = w_ct.T.astype(compute_dtype)
    wt_txt = w_txt.T.astype(compute_dtype)
    wt_lab = w_lab.T.astype(compute_dtype)

    kernel = functools.partial(_ot_aligner_kernel, eps=float(eps),
                               n_iter=int(n_iter), batch=B, tile_b=tile_b,
                               need_mask=need_mask)

    x_spec = pl.BlockSpec((tile_b, in_dim), lambda i: (i, 0))
    w_spec = _resident_spec((in_dim, proj_dim))

    aligned, partials = pl.pallas_call(
        kernel,
        out_shape=(
            jax.ShapeDtypeStruct((B, proj_dim), out_dtype),
            jax.ShapeDtypeStruct((num_tiles, 8, 128), jnp.float32),
        ),
        grid=(num_tiles,),
        in_specs=[x_spec, x_spec, x_spec, w_spec, w_spec, w_spec],
        out_specs=(
            pl.BlockSpec((tile_b, proj_dim), lambda i: (i, 0)),   # aligned
            pl.BlockSpec((1, 8, 128), lambda i: (i, 0, 0)),       # partial loss
        ),
        compiler_params=pltpu.CompilerParams(
            dimension_semantics=("parallel",),
            vmem_limit_bytes=_vmem_limit_bytes(),
        ),
    )(x_ct_c, x_txt_c, x_lab_c, wt_ct, wt_txt, wt_lab)

    # Tiny final reduction over num_tiles scalars, wrapper-side.
    loss = jnp.sum(partials[:, 0, 0]) / (3.0 * B)
    if n_iter >= 1:
        loss = loss - eps          # entropic term at the Sinkhorn fixed point
    return aligned, loss


# ----------------------------------------------------------------------------
# Pure-JAX reference mirroring the PyTorch module (for sanity checking)
# ----------------------------------------------------------------------------
def _reference_forward(x_ct, x_txt, x_lab, w_ct, w_txt, w_lab,
                       *, eps=0.05, n_iter=50):
    hp = lax.Precision.HIGHEST
    z_ct = jnp.matmul(x_ct, w_ct.T, precision=hp)
    z_txt = jnp.matmul(x_txt, w_txt.T, precision=hp)
    z_lab = jnp.matmul(x_lab, w_lab.T, precision=hp)

    def sinkhorn(zx, zy):
        x = zx[:, None, :]
        y = zy[:, None, :]
        B, N, _ = x.shape
        C = jnp.sum((x[:, :, None, :] - y[:, None, :, :]) ** 2, axis=-1)
        log_u = jnp.zeros((B, N))
        log_v = jnp.zeros((B, N))
        log_a = log_b = -math.log(N)
        log_K = -C / eps
        for _ in range(n_iter):
            log_u = log_a - jax.nn.logsumexp(log_K + log_v[:, None, :], axis=-1)
            log_v = log_b - jax.nn.logsumexp(log_K + log_u[:, :, None], axis=-2)
        log_T = log_K + log_u[:, :, None] + log_v[:, None, :]
        T = jnp.exp(log_T)
        transport = jnp.sum(T * C, axis=(1, 2))
        entropic = eps * jnp.sum(T * (log_T - 1.0), axis=(1, 2))
        return jnp.mean(transport + entropic)

    ot_loss = (sinkhorn(z_ct, z_txt) + sinkhorn(z_ct, z_lab)
               + sinkhorn(z_txt, z_lab)) / 3.0
    aligned = (z_ct + z_txt + z_lab) / 3.0
    return aligned, ot_loss


# ----------------------------------------------------------------------------
# Demo / self-check
# ----------------------------------------------------------------------------
if __name__ == "__main__":
    B, IN_DIM, PROJ_DIM = 2, 32, 128
    EPS, N_ITER = 0.05, 50

    key = jax.random.PRNGKey(0)
    k_xct, k_xtxt, k_xlab, k_wct, k_wtxt, k_wlab = jax.random.split(key, 6)

    x_ct = jax.random.normal(k_xct, (B, IN_DIM), dtype=jnp.float32)
    x_txt = jax.random.normal(k_xtxt, (B, IN_DIM), dtype=jnp.float32)
    x_lab = jax.random.normal(k_xlab, (B, IN_DIM), dtype=jnp.float32)

    # nn.Linear(in_dim, proj_dim, bias=False) weight layout: [proj_dim, in_dim].
    bound = 1.0 / math.sqrt(IN_DIM)
    w_ct = jax.random.uniform(k_wct, (PROJ_DIM, IN_DIM), jnp.float32, -bound, bound)
    w_txt = jax.random.uniform(k_wtxt, (PROJ_DIM, IN_DIM), jnp.float32, -bound, bound)
    w_lab = jax.random.uniform(k_wlab, (PROJ_DIM, IN_DIM), jnp.float32, -bound, bound)

    ref_aligned, ref_loss = _reference_forward(
        x_ct, x_txt, x_lab, w_ct, w_txt, w_lab, eps=EPS, n_iter=N_ITER)

    # 1) Default (bf16 compute) path.
    aligned, ot_loss = ot_aligner_forward(
        x_ct, x_txt, x_lab, w_ct, w_txt, w_lab, eps=EPS, n_iter=N_ITER)
    jax.block_until_ready((aligned, ot_loss))
    assert aligned.shape == (B, PROJ_DIM) and aligned.dtype == jnp.float32
    assert jnp.allclose(aligned, ref_aligned, atol=5e-2, rtol=5e-2)
    assert jnp.allclose(ot_loss, ref_loss, atol=2e-2, rtol=2e-2)

    # 2) f32 compute path: tight check of the closed-form Sinkhorn + matmuls.
    aligned32, loss32 = ot_aligner_forward(
        x_ct, x_txt, x_lab, w_ct, w_txt, w_lab, eps=EPS, n_iter=N_ITER,
        compute_dtype=jnp.float32)
    jax.block_until_ready((aligned32, loss32))
    assert jnp.allclose(aligned32, ref_aligned, atol=1e-3, rtol=1e-3)
    assert jnp.allclose(loss32, ref_loss, atol=1e-3, rtol=1e-3)

    # 3) Multi-tile grid with a padded last tile (exercises masking + the
    #    even-tile-count parallel batch axis).
    B2 = 20
    k2a, k2b, k2c = jax.random.split(jax.random.PRNGKey(1), 3)
    x2_ct = jax.random.normal(k2a, (B2, IN_DIM), dtype=jnp.float32)
    x2_txt = jax.random.normal(k2b, (B2, IN_DIM), dtype=jnp.float32)
    x2_lab = jax.random.normal(k2c, (B2, IN_DIM), dtype=jnp.float32)
    a2, l2 = ot_aligner_forward(x2_ct, x2_txt, x2_lab, w_ct, w_txt, w_lab,
                                eps=EPS, n_iter=N_ITER,
                                compute_dtype=jnp.float32)
    jax.block_until_ready((a2, l2))
    r2_a, r2_l = _reference_forward(x2_ct, x2_txt, x2_lab, w_ct, w_txt, w_lab,
                                    eps=EPS, n_iter=N_ITER)
    assert jnp.allclose(a2, r2_a, atol=1e-3, rtol=1e-3)
    assert jnp.allclose(l2, r2_l, atol=1e-3, rtol=1e-3)

    # 4) n_iter == 0 branch (closed form -eps * mean(exp(-C/eps))).
    a0, l0 = ot_aligner_forward(x_ct, x_txt, x_lab, w_ct, w_txt, w_lab,
                                eps=EPS, n_iter=0, compute_dtype=jnp.float32)
    jax.block_until_ready((a0, l0))
    r0_a, r0_l = _reference_forward(x_ct, x_txt, x_lab, w_ct, w_txt, w_lab,
                                    eps=EPS, n_iter=0)
    assert jnp.allclose(a0, r0_a, atol=1e-3, rtol=1e-3)
    assert jnp.allclose(l0, r0_l, atol=1e-3, rtol=1e-3)

    print("KERNEL_OK")
</pallas_src>

<mosaic_0001>
module attributes {stable_mosaic.version = 11 : i64} {
  func.func @_ot_aligner_kernel(%arg0: i32, %arg1: memref<2x32xbf16, #tpu.memory_space<vmem>>, %arg2: memref<2x32xbf16, #tpu.memory_space<vmem>>, %arg3: memref<2x32xbf16, #tpu.memory_space<vmem>>, %arg4: memref<32x128xbf16, #tpu.memory_space<vmem>>, %arg5: memref<32x128xbf16, #tpu.memory_space<vmem>>, %arg6: memref<32x128xbf16, #tpu.memory_space<vmem>>, %arg7: memref<2x128xf32, #tpu.memory_space<vmem>>, %arg8: memref<1x8x128xf32, #tpu.memory_space<vmem>>) attributes {dimension_semantics = [#tpu.dimension_semantics<parallel>], iteration_bounds = array<i64: 1>, scalar_prefetch = 0 : i64, scratch_operands = 0 : i64, tpu.core_type = #tpu.core_type<tc>, window_params = [{transform_indices = @transform_0, window_bounds = array<i64: 2, 32>}, {transform_indices = @transform_1, window_bounds = array<i64: 2, 32>}, {transform_indices = @transform_2, window_bounds = array<i64: 2, 32>}, {pipeline_mode = #tpu.pipeline_mode<synchronous>, transform_indices = @transform_3, window_bounds = array<i64: 32, 128>}, {pipeline_mode = #tpu.pipeline_mode<synchronous>, transform_indices = @transform_4, window_bounds = array<i64: 32, 128>}, {pipeline_mode = #tpu.pipeline_mode<synchronous>, transform_indices = @transform_5, window_bounds = array<i64: 32, 128>}, {transform_indices = @transform_6, window_bounds = array<i64: 2, 128>}, {transform_indices = @transform_7, window_bounds = array<i64: 1, 8, 128>}]} {
    %c0 = arith.constant 0 : index
    %c0_0 = arith.constant 0 : index
    %0 = vector.load %arg1[%c0, %c0_0] : memref<2x32xbf16, #tpu.memory_space<vmem>>, vector<2x32xbf16>
    %c0_1 = arith.constant 0 : index
    %c0_2 = arith.constant 0 : index
    %1 = vector.load %arg4[%c0_1, %c0_2] : memref<32x128xbf16, #tpu.memory_space<vmem>>, vector<32x128xbf16>
    %cst = arith.constant dense<0.000000e+00> : vector<2x128xf32>
    %2 = tpu.matmul %0, %1, %cst {dimension_numbers = #tpu.dot_dimension_numbers<[1], [0], [0], [1], [0, 0, 1, 1], [], []>} : vector<2x32xbf16>, vector<32x128xbf16>, vector<2x128xf32> -> vector<2x128xf32>
    %c0_3 = arith.constant 0 : index
    %c0_4 = arith.constant 0 : index
    %3 = vector.load %arg2[%c0_3, %c0_4] : memref<2x32xbf16, #tpu.memory_space<vmem>>, vector<2x32xbf16>
    %c0_5 = arith.constant 0 : index
    %c0_6 = arith.constant 0 : index
    %4 = vector.load %arg5[%c0_5, %c0_6] : memref<32x128xbf16, #tpu.memory_space<vmem>>, vector<32x128xbf16>
    %cst_7 = arith.constant dense<0.000000e+00> : vector<2x128xf32>
    %5 = tpu.matmul %3, %4, %cst_7 {dimension_numbers = #tpu.dot_dimension_numbers<[1], [0], [0], [1], [0, 0, 1, 1], [], []>} : vector<2x32xbf16>, vector<32x128xbf16>, vector<2x128xf32> -> vector<2x128xf32>
    %c0_8 = arith.constant 0 : index
    %c0_9 = arith.constant 0 : index
    %6 = vector.load %arg3[%c0_8, %c0_9] : memref<2x32xbf16, #tpu.memory_space<vmem>>, vector<2x32xbf16>
    %c0_10 = arith.constant 0 : index
    %c0_11 = arith.constant 0 : index
    %7 = vector.load %arg6[%c0_10, %c0_11] : memref<32x128xbf16, #tpu.memory_space<vmem>>, vector<32x128xbf16>
    %cst_12 = arith.constant dense<0.000000e+00> : vector<2x128xf32>
    %8 = tpu.matmul %6, %7, %cst_12 {dimension_numbers = #tpu.dot_dimension_numbers<[1], [0], [0], [1], [0, 0, 1, 1], [], []>} : vector<2x32xbf16>, vector<32x128xbf16>, vector<2x128xf32> -> vector<2x128xf32>
    %9 = arith.addf %2, %5 : vector<2x128xf32>
    %10 = arith.addf %9, %8 : vector<2x128xf32>
    %cst_13 = arith.constant 0.333333343 : f32
    %11 = vector.broadcast %cst_13 : f32 to vector<2x128xf32>
    %12 = arith.mulf %10, %11 : vector<2x128xf32>
    %c0_14 = arith.constant 0 : index
    %c0_15 = arith.constant 0 : index
    %13 = vector.load %arg7[%c0_14, %c0_15] : memref<2x128xf32, #tpu.memory_space<vmem>>, vector<2x128xf32>
    tpu.vector_store %arg7[%c0_14, %c0_15], %12 {strides = array<i32>} : memref<2x128xf32, #tpu.memory_space<vmem>>, vector<2x128xf32>,
    %14 = arith.subf %2, %5 : vector<2x128xf32>
    %15 = arith.subf %2, %8 : vector<2x128xf32>
    %16 = arith.subf %15, %14 : vector<2x128xf32>
    %17 = arith.mulf %14, %14 : vector<2x128xf32>
    %cst_16 = arith.constant dense<0.000000e+00> : vector<2xf32>
    %18 = vector.multi_reduction <add>, %17, %cst_16 [1] : vector<2x128xf32> to vector<2xf32>
    %19 = vector.shape_cast %18 : vector<2xf32> to vector<2x1xf32>
    %20 = arith.mulf %15, %15 : vector<2x128xf32>
    %cst_17 = arith.constant dense<0.000000e+00> : vector<2xf32>
    %21 = vector.multi_reduction <add>, %20, %cst_17 [1] : vector<2x128xf32> to vector<2xf32>
    %22 = vector.shape_cast %21 : vector<2xf32> to vector<2x1xf32>
    %23 = arith.mulf %16, %16 : vector<2x128xf32>
    %cst_18 = arith.constant dense<0.000000e+00> : vector<2xf32>
    %24 = vector.multi_reduction <add>, %23, %cst_18 [1] : vector<2x128xf32> to vector<2xf32>
    %25 = vector.shape_cast %24 : vector<2xf32> to vector<2x1xf32>
    %26 = arith.addf %19, %22 : vector<2x1xf32>
    %27 = arith.addf %26, %25 : vector<2x1xf32>
    %28 = vector.shape_cast %27 : vector<2x1xf32> to vector<1x2x1xf32>
    %cst_19 = arith.constant dense<0.000000e+00> : vector<1xf32>
    %29 = vector.multi_reduction <add>, %28, %cst_19 [1, 2] : vector<1x2x1xf32> to vector<1xf32>
    %30 = vector.shape_cast %29 : vector<1xf32> to vector<1x1x1xf32>
    %31 = vector.extract %30[0, 0, 0] : f32 from vector<1x1x1xf32>
    %32 = vector.broadcast %31 : f32 to vector<1x8x128xf32>
    %c0_20 = arith.constant 0 : index
    %c0_21 = arith.constant 0 : index
    %c0_22 = arith.constant 0 : index
    %33 = vector.load %arg8[%c0_20, %c0_21, %c0_22] : memref<1x8x128xf32, #tpu.memory_space<vmem>>, vector<1x8x128xf32>
    tpu.vector_store %arg8[%c0_20, %c0_21, %c0_22], %32 {strides = array<i32>} : memref<1x8x128xf32, #tpu.memory_space<vmem>>, vector<1x8x128xf32>,
    return
  }
  func.func @transform_0(%arg0: i32) -> (i32, i32) {
    %c0_i32 = arith.constant 0 : i32
    %c0_i32_0 = arith.constant 0 : i32
    return %arg0, %c0_i32 : i32, i32
  }
  func.func @transform_1(%arg0: i32) -> (i32, i32) {
    %c0_i32 = arith.constant 0 : i32
    %c0_i32_0 = arith.constant 0 : i32
    return %arg0, %c0_i32 : i32, i32
  }
  func.func @transform_2(%arg0: i32) -> (i32, i32) {
    %c0_i32 = arith.constant 0 : i32
    %c0_i32_0 = arith.constant 0 : i32
    return %arg0, %c0_i32 : i32, i32
  }
  func.func @transform_3(%arg0: i32) -> (i32, i32) {
    %c0_i32 = arith.constant 0 : i32
    %c0_i32_0 = arith.constant 0 : i32
    %c0_i32_1 = arith.constant 0 : i32
    return %c0_i32, %c0_i32_0 : i32, i32
  }
  func.func @transform_4(%arg0: i32) -> (i32, i32) {
    %c0_i32 = arith.constant 0 : i32
    %c0_i32_0 = arith.constant 0 : i32
    %c0_i32_1 = arith.constant 0 : i32
    return %c0_i32, %c0_i32_0 : i32, i32
  }
  func.func @transform_5(%arg0: i32) -> (i32, i32) {
    %c0_i32 = arith.constant 0 : i32
    %c0_i32_0 = arith.constant 0 : i32
    %c0_i32_1 = arith.constant 0 : i32
    return %c0_i32, %c0_i32_0 : i32, i32
  }
  func.func @transform_6(%arg0: i32) -> (i32, i32) {
    %c0_i32 = arith.constant 0 : i32
    %c0_i32_0 = arith.constant 0 : i32
    return %arg0, %c0_i32 : i32, i32
  }
  func.func @transform_7(%arg0: i32) -> (i32, i32, i32) {
    %c0_i32 = arith.constant 0 : i32
    %c0_i32_0 = arith.constant 0 : i32
    %c0_i32_1 = arith.constant 0 : i32
    return %arg0, %c0_i32, %c0_i32_0 : i32, i32, i32
  }
}

</mosaic_0001>

<llo_original>
// kernel: tpu_custom_call.1
$region0: #{tpu_custom_call.1}
  #allocation0 [shape = 'u32[]', space=smem, size = 0x4, offset = 0x4, fixed_abs, tag = 'smem constant byte address 0x4 - core index']
  #allocation1 [shape = 'u32[144,128]{1,0:T(1,128)}', space=vmem, size = 0x12000, scoped, tag = 'internal scratch']
  %s0 = inlined_call_operand.hbm [shape: bf16[2,32], index: 0, kind: input, shape index: {}]
  %s1 = inlined_call_operand.vmem [shape: bf16[2,32], index: 1, kind: input, shape index: {}]
  %s2 = inlined_call_operand.vmem [shape: bf16[2,32], index: 2, kind: input, shape index: {}]
  %s3 = inlined_call_operand.hbm [shape: bf16[32,128], index: 3, kind: input, shape index: {}]
  %s4 = inlined_call_operand.hbm [shape: bf16[32,128], index: 4, kind: input, shape index: {}]
  %s5 = inlined_call_operand.vmem [shape: bf16[32,128], index: 5, kind: input, shape index: {}]
  %s6 = inlined_call_operand.hbm [shape: f32[2,128], index: 6, kind: output, shape index: {0}]
  %s7 = inlined_call_operand.hbm [shape: f32[1,8,128], index: 7, kind: output, shape index: {1}]
  %8 = xla_tuple %s6, %s7
  %s9 = sld [smem:[#allocation0]]
  $region54: #{tpu_custom_call.1} parent=0
    _
  %s11 = ssub.s32 1, %s9
  %s12 = scalar_select 0, %s11, %s9
  $region1: #{tpu_custom_call.1} parent=0
    #allocation2 [shape = 'u8[512]{0}', space=vmem, size = 0x400, scoped, tag = 'input window, operand 0, single buffered']
    #allocation3 [shape = 's32[1]{0}', space=sflag, size = 0x4, scoped, tag = 'scoped memory for tpu_custom_call.1']
    #allocation4 [shape = 's32[1]{0}', space=sflag, size = 0x4, scoped, tag = 'scoped memory for tpu_custom_call.1']
    #allocation5 [shape = 'u8[8192]{0}', space=vmem, size = 0x2000, scoped, tag = 'input window, operand 3, single buffered']
    #allocation6 [shape = 's32[1]{0}', space=sflag, size = 0x4, scoped, tag = 'scoped memory for tpu_custom_call.1']
    #allocation7 [shape = 'u8[8192]{0}', space=vmem, size = 0x2000, scoped, tag = 'input window, operand 4, single buffered']
    #allocation8 [shape = 'u8[1024]{0}', space=vmem, size = 0x400, scoped, tag = 'output window, operand 0, single buffered']
    #allocation9 [shape = 'u8[4096]{0}', space=vmem, size = 0x1000, scoped, tag = 'output window, operand 1, single buffered']
    #allocation10 [shape = 's32[1]{0}', space=sflag, size = 0x4, scoped, tag = 'scoped memory for tpu_custom_call.1']
    %13 = vsyncpa [#allocation3], 0
    %14 = vsyncpa [#allocation6], 0
    %15 = vsyncpa [#allocation4], 0
    %16 = vsyncpa [#allocation10], 0
    // Predicated region
    $region2: #{tpu_custom_call.1} parent=1 // pred_check
      _
    $region3: #{tpu_custom_call.1} parent=1 // pred_check_branch
      %18 = sbr.rel (0) target = $region5
    $region4: #{tpu_custom_call.1} parent=1 // pred_region
      %s20 = ssub.s32 16, 16
      %21 = vsyncadd [#allocation3], %s20
      %s23 = sshll.u32 [#allocation2], 4
      %s24 = int_to_ptr.vmem [resolvable:$true] %s23
      %26 = dma.hbm_to_vmem [thread:$0]  %s0, 16, %s24, [#allocation3]
    $region5: #{tpu_custom_call.1} parent=1 // pred_fallthru
      _
    // Predicated region
    $region6: #{tpu_custom_call.1} parent=1 // pred_check
      _
    $region7: #{tpu_custom_call.1} parent=1 // pred_check_branch
      %28 = sbr.rel (0) target = $region9
    $region8: #{tpu_custom_call.1} parent=1 // pred_region
      _
    $region9: #{tpu_custom_call.1} parent=1 // pred_fallthru
      _
    // Predicated region
    $region10: #{tpu_custom_call.1} parent=1 // pred_check
      _
    $region11: #{tpu_custom_call.1} parent=1 // pred_check_branch
      %30 = sbr.rel (0) target = $region13
    $region12: #{tpu_custom_call.1} parent=1 // pred_region
      _
    $region13: #{tpu_custom_call.1} parent=1 // pred_fallthru
      _
    // Predicated region
    $region14: #{tpu_custom_call.1} parent=1 // pred_check
      _
    $region15: #{tpu_custom_call.1} parent=1 // pred_check_branch
      %32 = sbr.rel (0) target = $region17
    $region16: #{tpu_custom_call.1} parent=1 // pred_region
      %s34 = ssub.s32 256, 256
      %35 = vsyncadd [#allocation6], %s34
      %s36 = sshll.u32 [#allocation5], 4
      %s37 = int_to_ptr.vmem [resolvable:$true] %s36
      %42 = dma.hbm_to_vmem [thread:$0]  %s3, 256, %s37, [#allocation6], 64, 64, 4
    $region17: #{tpu_custom_call.1} parent=1 // pred_fallthru
      _
    // Predicated region
    $region18: #{tpu_custom_call.1} parent=1 // pred_check
      _
    $region19: #{tpu_custom_call.1} parent=1 // pred_check_branch
      %44 = sbr.rel (0) target = $region21
    $region20: #{tpu_custom_call.1} parent=1 // pred_region
      %s46 = ssub.s32 256, 256
      %47 = vsyncadd [#allocation6], %s46
      %s48 = sshll.u32 [#allocation7], 4
      %s49 = int_to_ptr.vmem [resolvable:$true] %s48
      %54 = dma.hbm_to_vmem [thread:$0]  %s4, 256, %s49, [#allocation6], 64, 64, 4
    $region21: #{tpu_custom_call.1} parent=1 // pred_fallthru
      _
    // Predicated region
    $region22: #{tpu_custom_call.1} parent=1 // pred_check
      _
    $region23: #{tpu_custom_call.1} parent=1 // pred_check_branch
      %56 = sbr.rel (0) target = $region25
    $region24: #{tpu_custom_call.1} parent=1 // pred_region
      _
    $region25: #{tpu_custom_call.1} parent=1 // pred_fallthru
      _
    // Predicated region
    $region26: #{tpu_custom_call.1} parent=1 // pred_check
      _
    $region27: #{tpu_custom_call.1} parent=1 // pred_check_branch
      %58 = sbr.rel (0) target = $region29
    $region28: #{tpu_custom_call.1} parent=1 // pred_region
      %59 = dma.done [#allocation3], 16
    $region29: #{tpu_custom_call.1} parent=1 // pred_fallthru
      _
    // Predicated region
    $region30: #{tpu_custom_call.1} parent=1 // pred_check
      _
    $region31: #{tpu_custom_call.1} parent=1 // pred_check_branch
      %61 = sbr.rel (0) target = $region33
    $region32: #{tpu_custom_call.1} parent=1 // pred_region
      %62 = dma.done [#allocation6], 256
    $region33: #{tpu_custom_call.1} parent=1 // pred_fallthru
      _
    // Predicated region
    $region34: #{tpu_custom_call.1} parent=1 // pred_check
      _
    $region35: #{tpu_custom_call.1} parent=1 // pred_check_branch
      %64 = sbr.rel (0) target = $region37
    $region36: #{tpu_custom_call.1} parent=1 // pred_region
      %65 = dma.done [#allocation6], 256
    $region37: #{tpu_custom_call.1} parent=1 // pred_fallthru
      _
    %v67 = vld [vmem:[#allocation2] sm:$0x1]
    %v68 = vld [vmem:[#allocation5] sm:$0xf]
    %v69 = vld [vmem:[#allocation5 + $0x4] sm:$0xf]
    %v70 = vld [vmem:[#allocation5 + $0x8] sm:$0xf]
    %v71 = vld [vmem:[#allocation5 + $0xc] sm:$0xf]
    %v76 = vunpack.c.l.b16 %v68
    %v77 = vunpack.c.l.b16 %v69
    %v78 = vunpack.c.l.b16 %v70
    %v79 = vunpack.c.l.b16 %v71
    %v80 = vpack.c.b16 %v77, %v76
    %v81 = vpack.c.b16 %v79, %v78
    %vm84 = vcmask 261120
    %v86 = vsel %vm84, %v67, 0
    %88 = vmatprep.subr.bf16.mxu0 0
    %89 = vmatpush1.bf16.msra.mxu0 %v80
    %90 = vmatprep.subr.bf16.mxu0 0
    %91 = vmatpush1.bf16.msra.mxu0 %v81
    %92 = vmatprep.subr.bf16.mxu0 0
    %93 = vmatpush1.bf16.msra.mxu0 0
    %94 = vmatprep.subr.bf16.mxu0 0
    %95 = vmatpush1.bf16.msra.mxu0 0
    %96 = vmatprep.subr.bf16.mxu0 0
    %97 = vmatpush1.bf16.msra.mxu0 0
    %98 = vmatprep.subr.bf16.mxu0 0
    %99 = vmatpush1.bf16.msra.mxu0 0
    %100 = vmatprep.subr.bf16.mxu0 0
    %101 = vmatpush1.bf16.msra.mxu0 0
    %102 = vmatprep.subr.bf16.mxu0 0
    %103 = vmatpush1.bf16.msra.mxu0 0
    %104 = vmatprep.subr.bf16.mxu0 0
    %105 = vmatpush1.bf16.msra.mxu0 0
    %106 = vmatprep.subr.bf16.mxu0 0
    %107 = vmatpush1.bf16.msra.mxu0 0
    %108 = vmatprep.subr.bf16.mxu0 0
    %109 = vmatpush1.bf16.msra.mxu0 0
    %110 = vmatprep.subr.bf16.mxu0 0
    %111 = vmatpush1.bf16.msra.mxu0 0
    %112 = vmatprep.subr.bf16.mxu0 0
    %113 = vmatpush1.bf16.msra.mxu0 0
    %114 = vmatprep.subr.bf16.mxu0 0
    %115 = vmatpush1.bf16.msra.mxu0 0
    %116 = vmatprep.subr.bf16.mxu0 0
    %117 = vmatpush1.bf16.msra.mxu0 0
    %118 = vmatprep.subr.bf16.mxu0 0
    %119 = vmatpush1.bf16.msra.mxu0 0
    %120 = vmatprep.mubr.bf16.mxu0 0
    %121 = vmatmul.mubr.bf16.gmra.mrb[0].mxu0 %v86
    %v122 = vpop.f32.mrb[0].mxu0
    %v123 = vadd.f32 0.0, %v122
    %v124 = vpop.f32.mrb[0].mxu0
    %v125 = vpop.f32.mrb[0].mxu0
    %v126 = vpop.f32.mrb[0].mxu0
    %127 = vdwg.mxu0
    %v128 = vld [vmem:[%s1] sm:$0x1]
    %v129 = vld [vmem:[#allocation7] sm:$0xf]
    %v130 = vld [vmem:[#allocation7 + $0x4] sm:$0xf]
    %v131 = vld [vmem:[#allocation7 + $0x8] sm:$0xf]
    %v132 = vld [vmem:[#allocation7 + $0xc] sm:$0xf]
    %v137 = vunpack.c.l.b16 %v129
    %v138 = vunpack.c.l.b16 %v130
    %v139 = vunpack.c.l.b16 %v131
    %v140 = vunpack.c.l.b16 %v132
    %v141 = vpack.c.b16 %v138, %v137
    %v142 = vpack.c.b16 %v140, %v139
    %v146 = vsel %vm84, %v128, 0
    %148 = vmatprep.subr.bf16.mxu0 0
    %149 = vmatpush1.bf16.msra.mxu0 %v141
    %150 = vmatprep.subr.bf16.mxu0 0
    %151 = vmatpush1.bf16.msra.mxu0 %v142
    %152 = vmatprep.subr.bf16.mxu0 0
    %153 = vmatpush1.bf16.msra.mxu0 0
    %154 = vmatprep.subr.bf16.mxu0 0
    %155 = vmatpush1.bf16.msra.mxu0 0
    %156 = vmatprep.subr.bf16.mxu0 0
    %157 = vmatpush1.bf16.msra.mxu0 0
    %158 = vmatprep.subr.bf16.mxu0 0
    %159 = vmatpush1.bf16.msra.mxu0 0
    %160 = vmatprep.subr.bf16.mxu0 0
    %161 = vmatpush1.bf16.msra.mxu0 0
    %162 = vmatprep.subr.bf16.mxu0 0
    %163 = vmatpush1.bf16.msra.mxu0 0
    %164 = vmatprep.subr.bf16.mxu0 0
    %165 = vmatpush1.bf16.msra.mxu0 0
    %166 = vmatprep.subr.bf16.mxu0 0
    %167 = vmatpush1.bf16.msra.mxu0 0
    %168 = vmatprep.subr.bf16.mxu0 0
    %169 = vmatpush1.bf16.msra.mxu0 0
    %170 = vmatprep.subr.bf16.mxu0 0
    %171 = vmatpush1.bf16.msra.mxu0 0
    %172 = vmatprep.subr.bf16.mxu0 0
    %173 = vmatpush1.bf16.msra.mxu0 0
    %174 = vmatprep.subr.bf16.mxu0 0
    %175 = vmatpush1.bf16.msra.mxu0 0
    %176 = vmatprep.subr.bf16.mxu0 0
    %177 = vmatpush1.bf16.msra.mxu0 0
    %178 = vmatprep.subr.bf16.mxu0 0
    %179 = vmatpush1.bf16.msra.mxu0 0
    %180 = vmatprep.mubr.bf16.mxu0 0
    %181 = vmatmul.mubr.bf16.gmra.mrb[0].mxu0 %v146
    %v182 = vpop.f32.mrb[0].mxu0
    %v183 = vadd.f32 0.0, %v182
    %v184 = vpop.f32.mrb[0].mxu0
    %v185 = vpop.f32.mrb[0].mxu0
    %v186 = vpop.f32.mrb[0].mxu0
    %187 = vdwg.mxu0
    %v188 = vld [vmem:[%s2] sm:$0x1]
    %v189 = vld [vmem:[%s5] sm:$0xf]
    %v190 = vld [vmem:[%s5 + $0x4] sm:$0xf]
    %v191 = vld [vmem:[%s5 + $0x8] sm:$0xf]
    %v192 = vld [vmem:[%s5 + $0xc] sm:$0xf]
    %v197 = vunpack.c.l.b16 %v189
    %v198 = vunpack.c.l.b16 %v190
    %v199 = vunpack.c.l.b16 %v191
    %v200 = vunpack.c.l.b16 %v192
    %v201 = vpack.c.b16 %v198, %v197
    %v202 = vpack.c.b16 %v200, %v199
    %v206 = vsel %vm84, %v188, 0
    %208 = vmatprep.subr.bf16.mxu0 0
    %209 = vmatpush1.bf16.msra.mxu0 %v201
    %210 = vmatprep.subr.bf16.mxu0 0
    %211 = vmatpush1.bf16.msra.mxu0 %v202
    %212 = vmatprep.subr.bf16.mxu0 0
    %213 = vmatpush1.bf16.msra.mxu0 0
    %214 = vmatprep.subr.bf16.mxu0 0
    %215 = vmatpush1.bf16.msra.mxu0 0
    %216 = vmatprep.subr.bf16.mxu0 0
    %217 = vmatpush1.bf16.msra.mxu0 0
    %218 = vmatprep.subr.bf16.mxu0 0
    %219 = vmatpush1.bf16.msra.mxu0 0
    %220 = vmatprep.subr.bf16.mxu0 0
    %221 = vmatpush1.bf16.msra.mxu0 0
    %222 = vmatprep.subr.bf16.mxu0 0
    %223 = vmatpush1.bf16.msra.mxu0 0
    %224 = vmatprep.subr.bf16.mxu0 0
    %225 = vmatpush1.bf16.msra.mxu0 0
    %226 = vmatprep.subr.bf16.mxu0 0
    %227 = vmatpush1.bf16.msra.mxu0 0
    %228 = vmatprep.subr.bf16.mxu0 0
    %229 = vmatpush1.bf16.msra.mxu0 0
    %230 = vmatprep.subr.bf16.mxu0 0
    %231 = vmatpush1.bf16.msra.mxu0 0
    %232 = vmatprep.subr.bf16.mxu0 0
    %233 = vmatpush1.bf16.msra.mxu0 0
    %234 = vmatprep.subr.bf16.mxu0 0
    %235 = vmatpush1.bf16.msra.mxu0 0
    %236 = vmatprep.subr.bf16.mxu0 0
    %237 = vmatpush1.bf16.msra.mxu0 0
    %238 = vmatprep.subr.bf16.mxu0 0
    %239 = vmatpush1.bf16.msra.mxu0 0
    %240 = vmatprep.mubr.bf16.mxu0 0
    %241 = vmatmul.mubr.bf16.gmra.mrb[0].mxu0 %v206
    %v242 = vpop.f32.mrb[0].mxu0
    %v243 = vadd.f32 0.0, %v242
    %v244 = vpop.f32.mrb[0].mxu0
    %v245 = vpop.f32.mrb[0].mxu0
    %v246 = vpop.f32.mrb[0].mxu0
    %247 = vdwg.mxu0
    %v248 = vadd.f32 %v123, %v183
    %v249 = vadd.f32 %v248, %v243
    %v250 = vmul.f32 %v249, 0.33333334
    %251 = vst [vmem:[#allocation8] sm:$0x3] %v250
    %v252 = vsub.f32 %v123, %v183
    %v253 = vsub.f32 %v123, %v243
    %v254 = vsub.f32 %v253, %v252
    %v255 = vmul.f32 %v252, %v252
    %vm256 = vcmask 1041408
    %v257 = vsel %vm256, %v255, 0.0
    %258 = vadd.xlane.f32.xlu0 %v257
    %v259 = vpop.xlane.xlu0 %258
    %v260 = vmul.f32 %v253, %v253
    %v261 = vsel %vm256, %v260, 0.0
    %262 = vadd.xlane.f32.xlu0 %v261
    %v263 = vpop.xlane.xlu0 %262
    %v264 = vmul.f32 %v254, %v254
    %v265 = vsel %vm256, %v264, 0.0
    %266 = vadd.xlane.f32.xlu0 %v265
    %v267 = vpop.xlane.xlu0 %266
    %v268 = vadd.f32 %v259, %v263
    %v269 = vadd.f32 %v268, %v267
    %vm270 = vcmask 1024
    %v271 = vsel %vm270, %v269, 0.0
    %272 = vadd.xlane.f32.xlu0 %v271
    %v273 = vpop.xlane.xlu0 %272
    %v274 = vrot.slane %v273, 4
    %v275 = vadd.f32 %v273, %v274
    %v276 = vrot.slane %v275, 2
    %v277 = vadd.f32 %v275, %v276
    %v278 = vrot.slane %v277, 1
    %v279 = vadd.f32 %v277, %v278
    %s280 = vtos %v279
    %v281 = vstv %s280
    %282 = vst [vmem:[#allocation9] sm:$0xff] %v281
    // Predicated region
    $region38: #{tpu_custom_call.1} parent=1 // pred_check
      _
    $region39: #{tpu_custom_call.1} parent=1 // pred_check_branch
      %284 = sbr.rel (0) target = $region41
    $region40: #{tpu_custom_call.1} parent=1 // pred_region
      %s286 = ssub.s32 32, 32
      %287 = vsyncadd [#allocation4], %s286
      %s289 = sshll.u32 [#allocation8], 4
      %s290 = int_to_ptr.vmem [resolvable:$true] %s289
      %292 = dma.vmem_to_hbm [thread:$0]  %s290, 32, %s6, [#allocation4]
    $region41: #{tpu_custom_call.1} parent=1 // pred_fallthru
      _
    // Predicated region
    $region42: #{tpu_custom_call.1} parent=1 // pred_check
      _
    $region43: #{tpu_custom_call.1} parent=1 // pred_check_branch
      %294 = sbr.rel (0) target = $region45
    $region44: #{tpu_custom_call.1} parent=1 // pred_region
      %s296 = ssub.s32 128, 128
      %297 = vsyncadd [#allocation10], %s296
      %s299 = sshll.u32 [#allocation9], 4
      %s300 = int_to_ptr.vmem [resolvable:$true] %s299
      %302 = dma.vmem_to_hbm [thread:$0]  %s300, 128, %s7, [#allocation10]
    $region45: #{tpu_custom_call.1} parent=1 // pred_fallthru
      _
    // Predicated region
    $region46: #{tpu_custom_call.1} parent=1 // pred_check
      _
    $region47: #{tpu_custom_call.1} parent=1 // pred_check_branch
      %304 = sbr.rel (0) target = $region49
    $region48: #{tpu_custom_call.1} parent=1 // pred_region
      %305 = dma.done [#allocation4], 32
    $region49: #{tpu_custom_call.1} parent=1 // pred_fallthru
      _
    // Predicated region
    $region50: #{tpu_custom_call.1} parent=1 // pred_check
      _
    $region51: #{tpu_custom_call.1} parent=1 // pred_check_branch
      %307 = sbr.rel (0) target = $region53
    $region52: #{tpu_custom_call.1} parent=1 // pred_region
      %308 = dma.done [#allocation10], 128
    $region53: #{tpu_custom_call.1} parent=1 // pred_fallthru
      _
    %309 = vsyncpa [#allocation3], 1
    %310 = vsyncpa [#allocation6], 1
    %311 = vsyncpa [#allocation4], 1
    %312 = vsyncpa [#allocation10], 1

</llo_original>
